<compile_context>
chip_gen: v7x
topology: tpu7x:2x2x1
jax: 0.10.0
libtpu: 0.0.40
codegen_flags: <defaults>
</compile_context>

<pallas_src>
import jax
import jax.numpy as jnp
from jax import lax
from jax.experimental import pallas as pl
from jax.experimental.pallas import tpu as pltpu


_SUB = 8  # rows per sub-block (f32 sublane tile)
# TODO(synk): for bf16 k/v at the HBM boundary, bump _SUB to 16 (packed bf16
# sublane tiles), require block_t % 16 == 0, and keep arithmetic in f32.


def _wkv_power_kernel(td_ref, tf_ref, k_ref, v_ref, o_ref,
                      etf_ref, w8_ref, m1_ref, m2_ref, m4_ref, pow_ref,
                      ck_ref, cv_ref):
    """One (block_t, block_d) tile; time is the inner ('arbitrary') grid axis."""
    blk_d = k_ref.shape[1]

    # ---- once per time sweep: per-channel tables + carry reset --------------
    @pl.when(pl.program_id(1) == 0)
    def _():
        td = td_ref[...].astype(jnp.float32)                   # (1, blk_d)
        tf = tf_ref[...].astype(jnp.float32)
        w = jnp.exp(td)                                        # decay per step
        w2 = w * w
        w4 = w2 * w2
        row = lax.broadcasted_iota(jnp.int32, (_SUB, blk_d), 0)
        etf_ref[...] = jnp.broadcast_to(jnp.exp(tf), (_SUB, blk_d))
        w8_ref[...] = jnp.broadcast_to(w, (_SUB, blk_d))
        # Masked step weights for the Hillis-Steele scan: shift d -> w^d, rows < d -> 0.
        m1_ref[...] = jnp.where(row >= 1, jnp.broadcast_to(w, (_SUB, blk_d)), 0.0)
        m2_ref[...] = jnp.where(row >= 2, jnp.broadcast_to(w2, (_SUB, blk_d)), 0.0)
        m4_ref[...] = jnp.where(row >= 4, jnp.broadcast_to(w4, (_SUB, blk_d)), 0.0)
        # Carry-injection powers: pow[r] = w^(r+1).
        pow_ref[...] = jnp.exp(td * (row + 1).astype(jnp.float32))
        ck_ref[...] = jnp.zeros_like(ck_ref)
        cv_ref[...] = jnp.zeros_like(cv_ref)

    num_sub = k_ref.shape[0] // _SUB

    def body(sub, carries):
        ck, cv = carries                                       # (1, blk_d) f32
        base = pl.multiple_of(sub * _SUB, _SUB)
        kb = k_ref[pl.ds(base, _SUB), :].astype(jnp.float32)   # (8, blk_d)
        vb = v_ref[pl.ds(base, _SUB), :].astype(jnp.float32)
        kx = jnp.exp(kb)            # NOTE: overflows like the reference for k >~ 88
        vx = vb * kx

        w8 = w8_ref[...]
        m1 = m1_ref[...]
        m2 = m2_ref[...]
        m4 = m4_ref[...]
        pw = pow_ref[...]
        etf = etf_ref[...]

        def decay_scan(x):
            # b[i] = sum_{j<=i} w^(i-j+1) * x[j]  (log-depth; rolls hit the XLU
            # slot, the mul/adds are full-vreg VPU work).
            b = w8 * x
            b = b + m1 * pltpu.roll(b, 1, axis=0)
            b = b + m2 * pltpu.roll(b, 2, axis=0)
            b = b + m4 * pltpu.roll(b, 4, axis=0)
            return b

        kxr = decay_scan(kx) + pw * jnp.broadcast_to(ck, (_SUB, blk_d))
        vxr = decay_scan(vx) + pw * jnp.broadcast_to(cv, (_SUB, blk_d))

        num = vx * etf + kxr
        den = kx * etf + vxr
        out = num * pl.reciprocal(den, approx=False)
        o_ref[pl.ds(base, _SUB), :] = out.astype(o_ref.dtype)

        # New carries = last row of the running decayed sums.
        return kxr[_SUB - 1:_SUB, :], vxr[_SUB - 1:_SUB, :]

    if num_sub % 4 == 0:
        unroll = 4
    elif num_sub % 2 == 0:
        unroll = 2
    else:
        unroll = 1
    ckf, cvf = lax.fori_loop(0, num_sub, body, (ck_ref[...], cv_ref[...]),
                             unroll=unroll)
    ck_ref[...] = ckf
    cv_ref[...] = cvf


def _round_up(x, m):
    return ((x + m - 1) // m) * m


def wkv_power_forward(k, v, time_decay, time_first, *, block_t=None, block_d=None):
    assert k.ndim == 2 and k.shape == v.shape
    T, D = k.shape
    out_dtype = k.dtype

    # ---- tile selection (fixed, lane-dense; no gcd cliffs) -------------------
    d128 = _round_up(D, 128)
    if block_d is None:
        block_d = min(512, d128)
        # v7x has 2 TensorCores: give the "parallel" channel axis >=2 tiles
        # whenever the padded channel count allows (neutral on v5e/v6e).
        if d128 // block_d < 2 and d128 >= 256:
            block_d = max(128, (d128 // 2) // 128 * 128)
    assert block_d % 128 == 0

    t8 = _round_up(T, _SUB)
    if block_t is None:
        block_t = t8 if t8 <= 512 else 512   # big streaming chunks; ~6 MiB pipelined
    assert block_t % _SUB == 0

    Tp = _round_up(T, block_t)
    Dp = _round_up(D, block_d)

    # ---- padding (numerically inert; sliced off at the end) ------------------
    t_pad, d_pad = Tp - T, Dp - D
    if t_pad or d_pad:
        k = jnp.pad(k, ((0, t_pad), (0, d_pad)))
        v = jnp.pad(v, ((0, t_pad), (0, d_pad)))
        # Negative decay in pad lanes keeps their carries bounded for long T.
        time_decay = jnp.pad(time_decay, (0, d_pad), constant_values=-1.0)
        time_first = jnp.pad(time_first, (0, d_pad))

    td2 = time_decay.reshape(1, Dp).astype(jnp.float32)
    tf2 = time_first.reshape(1, Dp).astype(jnp.float32)

    grid = (Dp // block_d, Tp // block_t)   # (channels "parallel", time "arbitrary")

    out = pl.pallas_call(
        _wkv_power_kernel,
        out_shape=jax.ShapeDtypeStruct((Tp, Dp), out_dtype),
        grid_spec=pltpu.PrefetchScalarGridSpec(
            num_scalar_prefetch=0,
            grid=grid,
            in_specs=[
                pl.BlockSpec((1, block_d), lambda d, t: (0, d)),        # time_decay
                pl.BlockSpec((1, block_d), lambda d, t: (0, d)),        # time_first
                pl.BlockSpec((block_t, block_d), lambda d, t: (t, d)),  # k
                pl.BlockSpec((block_t, block_d), lambda d, t: (t, d)),  # v
            ],
            out_specs=pl.BlockSpec((block_t, block_d), lambda d, t: (t, d)),
            scratch_shapes=[
                pltpu.VMEM((_SUB, block_d), jnp.float32),  # exp(time_first), broadcast
                pltpu.VMEM((_SUB, block_d), jnp.float32),  # w, broadcast
                pltpu.VMEM((_SUB, block_d), jnp.float32),  # masked w^1 (scan step 1)
                pltpu.VMEM((_SUB, block_d), jnp.float32),  # masked w^2 (scan step 2)
                pltpu.VMEM((_SUB, block_d), jnp.float32),  # masked w^4 (scan step 3)
                pltpu.VMEM((_SUB, block_d), jnp.float32),  # w^(r+1) carry table
                pltpu.VMEM((1, block_d), jnp.float32),     # kxr carry
                pltpu.VMEM((1, block_d), jnp.float32),     # vxr carry
            ],
        ),
        compiler_params=pltpu.CompilerParams(
            dimension_semantics=("parallel", "arbitrary")),
    )(td2, tf2, k, v)

    if t_pad or d_pad:
        out = out[:T, :D]
    return out


def _reference(k, v, time_decay, time_first):
    # Pure-JAX replica of the PyTorch forward (quadratic form), for verification.
    T, D = k.shape
    ii = jnp.arange(T)[:, None]
    jj = jnp.arange(T)[None, :]
    lower = jj <= ii
    tri = jnp.where(lower, (ii - jj + 1).astype(jnp.float32), 0.0)[:, :, None]
    mask = lower[:, :, None].astype(jnp.float32)
    t = jnp.exp(time_decay[None, None, :] * tri) * mask
    kx = jnp.exp(k)
    vx = v * kx
    kxr = jnp.sum(kx[None, :, :] * t, axis=1)
    vxr = jnp.sum(vx[None, :, :] * t, axis=1)
    etf = jnp.exp(time_first)[None, :]
    return (vx * etf + kxr) / (kx * etf + vxr)


if __name__ == "__main__":
    T = 64
    dims = 256

    key = jax.random.PRNGKey(0)
    k_key, v_key, td_key, tf_key = jax.random.split(key, 4)

    k = jax.random.normal(k_key, (T, dims), dtype=jnp.float32)
    # Well-conditioned deterministic inputs: positive v keeps the denominator
    # away from zero; negative time_decay keeps the decayed sums finite.
    v = jnp.abs(jax.random.normal(v_key, (T, dims), dtype=jnp.float32)) + 0.1
    time_decay = -jnp.abs(jax.random.normal(td_key, (dims,), dtype=jnp.float32)) * 0.5
    time_first = jax.random.normal(tf_key, (dims,), dtype=jnp.float32) * 0.5

    ref = _reference(k, v, time_decay, time_first)

    # Small tiles force multiple time chunks and channel tiles so the carry
    # handoff and the "parallel" channel axis are both exercised: grid = (2, 2).
    out_small = wkv_power_forward(k, v, time_decay, time_first,
                                  block_t=32, block_d=128)
    out_small = jax.block_until_ready(out_small)
    assert out_small.shape == (T, dims)
    assert jnp.allclose(out_small, ref, rtol=2e-4, atol=1e-5), "mismatch (small tiles)"

    # Default (production) tile selection path.
    out = wkv_power_forward(k, v, time_decay, time_first)
    out = jax.block_until_ready(out)
    assert out.shape == (T, dims)
    assert jnp.allclose(out, ref, rtol=2e-4, atol=1e-5), "mismatch (default tiles)"

    print("KERNEL_OK")
</pallas_src>

<mosaic_0001>
module attributes {stable_mosaic.version = 11 : i64} {
  func.func @_wkv_power_kernel(%arg0: i32, %arg1: i32, %arg2: memref<1x128xf32, #tpu.memory_space<vmem>>, %arg3: memref<1x128xf32, #tpu.memory_space<vmem>>, %arg4: memref<32x128xf32, #tpu.memory_space<vmem>>, %arg5: memref<32x128xf32, #tpu.memory_space<vmem>>, %arg6: memref<32x128xf32, #tpu.memory_space<vmem>>, %arg7: memref<8x128xf32, #tpu.memory_space<vmem>>, %arg8: memref<8x128xf32, #tpu.memory_space<vmem>>, %arg9: memref<8x128xf32, #tpu.memory_space<vmem>>, %arg10: memref<8x128xf32, #tpu.memory_space<vmem>>, %arg11: memref<8x128xf32, #tpu.memory_space<vmem>>, %arg12: memref<8x128xf32, #tpu.memory_space<vmem>>, %arg13: memref<1x128xf32, #tpu.memory_space<vmem>>, %arg14: memref<1x128xf32, #tpu.memory_space<vmem>>) attributes {dimension_semantics = [#tpu.dimension_semantics<parallel>, #tpu.dimension_semantics<arbitrary>], iteration_bounds = array<i64: 2, 2>, scalar_prefetch = 0 : i64, scratch_operands = 8 : i64, tpu.core_type = #tpu.core_type<tc>, window_params = [{transform_indices = @transform_0, window_bounds = array<i64: 1, 128>}, {transform_indices = @transform_1, window_bounds = array<i64: 1, 128>}, {transform_indices = @transform_2, window_bounds = array<i64: 32, 128>}, {transform_indices = @transform_3, window_bounds = array<i64: 32, 128>}, {transform_indices = @transform_4, window_bounds = array<i64: 32, 128>}]} {
    %c0_i32 = arith.constant 0 : i32
    %0 = arith.cmpi eq, %arg1, %c0_i32 : i32
    %1 = arith.extui %0 : i1 to i32
    %c0_i32_0 = arith.constant 0 : i32
    %2 = arith.cmpi ne, %1, %c0_i32_0 : i32
    scf.if %2 {
      %c0_96 = arith.constant 0 : index
      %c0_97 = arith.constant 0 : index
      %215 = vector.load %arg2[%c0_96, %c0_97] : memref<1x128xf32, #tpu.memory_space<vmem>>, vector<1x128xf32>
      %c0_98 = arith.constant 0 : index
      %c0_99 = arith.constant 0 : index
      %216 = vector.load %arg3[%c0_98, %c0_99] : memref<1x128xf32, #tpu.memory_space<vmem>>, vector<1x128xf32>
      %217 = math.exp %215 : vector<1x128xf32>
      %218 = arith.mulf %217, %217 : vector<1x128xf32>
      %219 = arith.mulf %218, %218 : vector<1x128xf32>
      %220 = tpu.iota {dimensions = array<i32: 0>} : vector<8x128xi32>
      %221 = math.exp %216 : vector<1x128xf32>
      %222 = vector.shape_cast %221 : vector<1x128xf32> to vector<1x128xf32>
      %223 = vector.broadcast %222 : vector<1x128xf32> to vector<8x128xf32>
      %c0_100 = arith.constant 0 : index
      %c0_101 = arith.constant 0 : index
      %224 = vector.load %arg7[%c0_100, %c0_101] : memref<8x128xf32, #tpu.memory_space<vmem>>, vector<8x128xf32>
      tpu.vector_store %arg7[%c0_100, %c0_101], %223 {strides = array<i32>} : memref<8x128xf32, #tpu.memory_space<vmem>>, vector<8x128xf32>,
      %225 = vector.shape_cast %217 : vector<1x128xf32> to vector<1x128xf32>
      %226 = vector.broadcast %225 : vector<1x128xf32> to vector<8x128xf32>
      %c0_102 = arith.constant 0 : index
      %c0_103 = arith.constant 0 : index
      %227 = vector.load %arg8[%c0_102, %c0_103] : memref<8x128xf32, #tpu.memory_space<vmem>>, vector<8x128xf32>
      tpu.vector_store %arg8[%c0_102, %c0_103], %226 {strides = array<i32>} : memref<8x128xf32, #tpu.memory_space<vmem>>, vector<8x128xf32>,
      %c1_i32_104 = arith.constant 1 : i32
      %228 = vector.broadcast %c1_i32_104 : i32 to vector<8x128xi32>
      %229 = arith.cmpi sge, %220, %228 : vector<8x128xi32>
      %230 = vector.shape_cast %217 : vector<1x128xf32> to vector<1x128xf32>
      %231 = vector.broadcast %230 : vector<1x128xf32> to vector<8x128xf32>
      %cst = arith.constant 0.000000e+00 : f32
      %232 = vector.broadcast %cst : f32 to vector<8x128xf32>
      %233 = arith.select %229, %231, %232 : vector<8x128xi1>, vector<8x128xf32>
      %c0_105 = arith.constant 0 : index
      %c0_106 = arith.constant 0 : index
      %234 = vector.load %arg9[%c0_105, %c0_106] : memref<8x128xf32, #tpu.memory_space<vmem>>, vector<8x128xf32>
      tpu.vector_store %arg9[%c0_105, %c0_106], %233 {strides = array<i32>} : memref<8x128xf32, #tpu.memory_space<vmem>>, vector<8x128xf32>,
      %c2_i32_107 = arith.constant 2 : i32
      %235 = vector.broadcast %c2_i32_107 : i32 to vector<8x128xi32>
      %236 = arith.cmpi sge, %220, %235 : vector<8x128xi32>
      %237 = vector.shape_cast %218 : vector<1x128xf32> to vector<1x128xf32>
      %238 = vector.broadcast %237 : vector<1x128xf32> to vector<8x128xf32>
      %cst_108 = arith.constant 0.000000e+00 : f32
      %239 = vector.broadcast %cst_108 : f32 to vector<8x128xf32>
      %240 = arith.select %236, %238, %239 : vector<8x128xi1>, vector<8x128xf32>
      %c0_109 = arith.constant 0 : index
      %c0_110 = arith.constant 0 : index
      %241 = vector.load %arg10[%c0_109, %c0_110] : memref<8x128xf32, #tpu.memory_space<vmem>>, vector<8x128xf32>
      tpu.vector_store %arg10[%c0_109, %c0_110], %240 {strides = array<i32>} : memref<8x128xf32, #tpu.memory_space<vmem>>, vector<8x128xf32>,
      %c4_i32_111 = arith.constant 4 : i32
      %242 = vector.broadcast %c4_i32_111 : i32 to vector<8x128xi32>
      %243 = arith.cmpi sge, %220, %242 : vector<8x128xi32>
      %244 = vector.shape_cast %219 : vector<1x128xf32> to vector<1x128xf32>
      %245 = vector.broadcast %244 : vector<1x128xf32> to vector<8x128xf32>
      %cst_112 = arith.constant 0.000000e+00 : f32
      %246 = vector.broadcast %cst_112 : f32 to vector<8x128xf32>
      %247 = arith.select %243, %245, %246 : vector<8x128xi1>, vector<8x128xf32>
      %c0_113 = arith.constant 0 : index
      %c0_114 = arith.constant 0 : index
      %248 = vector.load %arg11[%c0_113, %c0_114] : memref<8x128xf32, #tpu.memory_space<vmem>>, vector<8x128xf32>
      tpu.vector_store %arg11[%c0_113, %c0_114], %247 {strides = array<i32>} : memref<8x128xf32, #tpu.memory_space<vmem>>, vector<8x128xf32>,
      %c1_i32_115 = arith.constant 1 : i32
      %249 = vector.broadcast %c1_i32_115 : i32 to vector<8x128xi32>
      %250 = arith.addi %220, %249 : vector<8x128xi32>
      %251 = arith.sitofp %250 : vector<8x128xi32> to vector<8x128xf32>
      %252 = vector.broadcast %215 : vector<1x128xf32> to vector<8x128xf32>
      %253 = arith.mulf %252, %251 : vector<8x128xf32>
      %254 = math.exp %253 : vector<8x128xf32>
      %c0_116 = arith.constant 0 : index
      %c0_117 = arith.constant 0 : index
      %255 = vector.load %arg12[%c0_116, %c0_117] : memref<8x128xf32, #tpu.memory_space<vmem>>, vector<8x128xf32>
      tpu.vector_store %arg12[%c0_116, %c0_117], %254 {strides = array<i32>} : memref<8x128xf32, #tpu.memory_space<vmem>>, vector<8x128xf32>,
      %cst_118 = arith.constant 0.000000e+00 : f32
      %256 = vector.broadcast %cst_118 : f32 to vector<1x128xf32>
      %c0_119 = arith.constant 0 : index
      %c0_120 = arith.constant 0 : index
      %257 = vector.load %arg13[%c0_119, %c0_120] : memref<1x128xf32, #tpu.memory_space<vmem>>, vector<1x128xf32>
      tpu.vector_store %arg13[%c0_119, %c0_120], %256 {strides = array<i32>} : memref<1x128xf32, #tpu.memory_space<vmem>>, vector<1x128xf32>,
      %cst_121 = arith.constant 0.000000e+00 : f32
      %258 = vector.broadcast %cst_121 : f32 to vector<1x128xf32>
      %c0_122 = arith.constant 0 : index
      %c0_123 = arith.constant 0 : index
      %259 = vector.load %arg14[%c0_122, %c0_123] : memref<1x128xf32, #tpu.memory_space<vmem>>, vector<1x128xf32>
      tpu.vector_store %arg14[%c0_122, %c0_123], %258 {strides = array<i32>} : memref<1x128xf32, #tpu.memory_space<vmem>>, vector<1x128xf32>,
    } else {
    }
    %c0 = arith.constant 0 : index
    %c0_1 = arith.constant 0 : index
    %3 = vector.load %arg13[%c0, %c0_1] : memref<1x128xf32, #tpu.memory_space<vmem>>, vector<1x128xf32>
    %c0_2 = arith.constant 0 : index
    %c0_3 = arith.constant 0 : index
    %4 = vector.load %arg14[%c0_2, %c0_3] : memref<1x128xf32, #tpu.memory_space<vmem>>, vector<1x128xf32>
    %c0_i32_4 = arith.constant 0 : i32
    %c8_i32 = arith.constant 8 : i32
    %5 = arith.muli %c0_i32_4, %c8_i32 : i32
    %6 = tpu.assume_multiple %5, 8 : i32
    %7 = arith.index_cast %6 : i32 to index
    %c0_5 = arith.constant 0 : index
    %8 = vector.load %arg4[%7, %c0_5] : memref<32x128xf32, #tpu.memory_space<vmem>>, vector<8x128xf32>
    %9 = arith.index_cast %6 : i32 to index
    %c0_6 = arith.constant 0 : index
    %10 = vector.load %arg5[%9, %c0_6] : memref<32x128xf32, #tpu.memory_space<vmem>>, vector<8x128xf32>
    %11 = math.exp %8 : vector<8x128xf32>
    %12 = arith.mulf %10, %11 : vector<8x128xf32>
    %c0_7 = arith.constant 0 : index
    %c0_8 = arith.constant 0 : index
    %13 = vector.load %arg8[%c0_7, %c0_8] : memref<8x128xf32, #tpu.memory_space<vmem>>, vector<8x128xf32>
    %c0_9 = arith.constant 0 : index
    %c0_10 = arith.constant 0 : index
    %14 = vector.load %arg9[%c0_9, %c0_10] : memref<8x128xf32, #tpu.memory_space<vmem>>, vector<8x128xf32>
    %c0_11 = arith.constant 0 : index
    %c0_12 = arith.constant 0 : index
    %15 = vector.load %arg10[%c0_11, %c0_12] : memref<8x128xf32, #tpu.memory_space<vmem>>, vector<8x128xf32>
    %c0_13 = arith.constant 0 : index
    %c0_14 = arith.constant 0 : index
    %16 = vector.load %arg11[%c0_13, %c0_14] : memref<8x128xf32, #tpu.memory_space<vmem>>, vector<8x128xf32>
    %c0_15 = arith.constant 0 : index
    %c0_16 = arith.constant 0 : index
    %17 = vector.load %arg12[%c0_15, %c0_16] : memref<8x128xf32, #tpu.memory_space<vmem>>, vector<8x128xf32>
    %c0_17 = arith.constant 0 : index
    %c0_18 = arith.constant 0 : index
    %18 = vector.load %arg7[%c0_17, %c0_18] : memref<8x128xf32, #tpu.memory_space<vmem>>, vector<8x128xf32>
    %19 = arith.mulf %13, %11 : vector<8x128xf32>
    %c1_i32 = arith.constant 1 : i32
    %20 = tpu.dynamic_rotate %19 by %c1_i32 dim 0 : vector<8x128xf32>, i32 -> vector<8x128xf32>
    %21 = arith.mulf %14, %20 : vector<8x128xf32>
    %22 = arith.addf %19, %21 : vector<8x128xf32>
    %c2_i32 = arith.constant 2 : i32
    %23 = tpu.dynamic_rotate %22 by %c2_i32 dim 0 : vector<8x128xf32>, i32 -> vector<8x128xf32>
    %24 = arith.mulf %15, %23 : vector<8x128xf32>
    %25 = arith.addf %22, %24 : vector<8x128xf32>
    %c4_i32 = arith.constant 4 : i32
    %26 = tpu.dynamic_rotate %25 by %c4_i32 dim 0 : vector<8x128xf32>, i32 -> vector<8x128xf32>
    %27 = arith.mulf %16, %26 : vector<8x128xf32>
    %28 = arith.addf %25, %27 : vector<8x128xf32>
    %29 = vector.shape_cast %3 : vector<1x128xf32> to vector<1x128xf32>
    %30 = vector.broadcast %29 : vector<1x128xf32> to vector<8x128xf32>
    %31 = arith.mulf %17, %30 : vector<8x128xf32>
    %32 = arith.addf %28, %31 : vector<8x128xf32>
    %33 = arith.mulf %13, %12 : vector<8x128xf32>
    %c1_i32_19 = arith.constant 1 : i32
    %34 = tpu.dynamic_rotate %33 by %c1_i32_19 dim 0 : vector<8x128xf32>, i32 -> vector<8x128xf32>
    %35 = arith.mulf %14, %34 : vector<8x128xf32>
    %36 = arith.addf %33, %35 : vector<8x128xf32>
    %c2_i32_20 = arith.constant 2 : i32
    %37 = tpu.dynamic_rotate %36 by %c2_i32_20 dim 0 : vector<8x128xf32>, i32 -> vector<8x128xf32>
    %38 = arith.mulf %15, %37 : vector<8x128xf32>
    %39 = arith.addf %36, %38 : vector<8x128xf32>
    %c4_i32_21 = arith.constant 4 : i32
    %40 = tpu.dynamic_rotate %39 by %c4_i32_21 dim 0 : vector<8x128xf32>, i32 -> vector<8x128xf32>
    %41 = arith.mulf %16, %40 : vector<8x128xf32>
    %42 = arith.addf %39, %41 : vector<8x128xf32>
    %43 = vector.shape_cast %4 : vector<1x128xf32> to vector<1x128xf32>
    %44 = vector.broadcast %43 : vector<1x128xf32> to vector<8x128xf32>
    %45 = arith.mulf %17, %44 : vector<8x128xf32>
    %46 = arith.addf %42, %45 : vector<8x128xf32>
    %47 = arith.mulf %12, %18 : vector<8x128xf32>
    %48 = arith.addf %47, %32 : vector<8x128xf32>
    %49 = arith.mulf %11, %18 : vector<8x128xf32>
    %50 = arith.addf %49, %46 : vector<8x128xf32>
    %51 = tpu.reciprocal %50 : vector<8x128xf32> -> vector<8x128xf32>
    %52 = arith.mulf %48, %51 : vector<8x128xf32>
    %53 = arith.index_cast %6 : i32 to index
    %c0_22 = arith.constant 0 : index
    %54 = vector.load %arg6[%53, %c0_22] : memref<32x128xf32, #tpu.memory_space<vmem>>, vector<8x128xf32>
    tpu.vector_store %arg6[%53, %c0_22], %52 {strides = array<i32>} : memref<32x128xf32, #tpu.memory_space<vmem>>, vector<8x128xf32>,
    %55 = vector.extract_strided_slice %32 {offsets = [7, 0], sizes = [1, 128], strides = [1, 1]} : vector<8x128xf32> to vector<1x128xf32>
    %56 = vector.extract_strided_slice %46 {offsets = [7, 0], sizes = [1, 128], strides = [1, 1]} : vector<8x128xf32> to vector<1x128xf32>
    %c1_i32_23 = arith.constant 1 : i32
    %c8_i32_24 = arith.constant 8 : i32
    %57 = arith.muli %c1_i32_23, %c8_i32_24 : i32
    %58 = tpu.assume_multiple %57, 8 : i32
    %59 = arith.index_cast %58 : i32 to index
    %c0_25 = arith.constant 0 : index
    %60 = vector.load %arg4[%59, %c0_25] : memref<32x128xf32, #tpu.memory_space<vmem>>, vector<8x128xf32>
    %61 = arith.index_cast %58 : i32 to index
    %c0_26 = arith.constant 0 : index
    %62 = vector.load %arg5[%61, %c0_26] : memref<32x128xf32, #tpu.memory_space<vmem>>, vector<8x128xf32>
    %63 = math.exp %60 : vector<8x128xf32>
    %64 = arith.mulf %62, %63 : vector<8x128xf32>
    %c0_27 = arith.constant 0 : index
    %c0_28 = arith.constant 0 : index
    %65 = vector.load %arg8[%c0_27, %c0_28] : memref<8x128xf32, #tpu.memory_space<vmem>>, vector<8x128xf32>
    %c0_29 = arith.constant 0 : index
    %c0_30 = arith.constant 0 : index
    %66 = vector.load %arg9[%c0_29, %c0_30] : memref<8x128xf32, #tpu.memory_space<vmem>>, vector<8x128xf32>
    %c0_31 = arith.constant 0 : index
    %c0_32 = arith.constant 0 : index
    %67 = vector.load %arg10[%c0_31, %c0_32] : memref<8x128xf32, #tpu.memory_space<vmem>>, vector<8x128xf32>
    %c0_33 = arith.constant 0 : index
    %c0_34 = arith.constant 0 : index
    %68 = vector.load %arg11[%c0_33, %c0_34] : memref<8x128xf32, #tpu.memory_space<vmem>>, vector<8x128xf32>
    %c0_35 = arith.constant 0 : index
    %c0_36 = arith.constant 0 : index
    %69 = vector.load %arg12[%c0_35, %c0_36] : memref<8x128xf32, #tpu.memory_space<vmem>>, vector<8x128xf32>
    %c0_37 = arith.constant 0 : index
    %c0_38 = arith.constant 0 : index
    %70 = vector.load %arg7[%c0_37, %c0_38] : memref<8x128xf32, #tpu.memory_space<vmem>>, vector<8x128xf32>
    %71 = arith.mulf %65, %63 : vector<8x128xf32>
    %c1_i32_39 = arith.constant 1 : i32
    %72 = tpu.dynamic_rotate %71 by %c1_i32_39 dim 0 : vector<8x128xf32>, i32 -> vector<8x128xf32>
    %73 = arith.mulf %66, %72 : vector<8x128xf32>
    %74 = arith.addf %71, %73 : vector<8x128xf32>
    %c2_i32_40 = arith.constant 2 : i32
    %75 = tpu.dynamic_rotate %74 by %c2_i32_40 dim 0 : vector<8x128xf32>, i32 -> vector<8x128xf32>
    %76 = arith.mulf %67, %75 : vector<8x128xf32>
    %77 = arith.addf %74, %76 : vector<8x128xf32>
    %c4_i32_41 = arith.constant 4 : i32
    %78 = tpu.dynamic_rotate %77 by %c4_i32_41 dim 0 : vector<8x128xf32>, i32 -> vector<8x128xf32>
    %79 = arith.mulf %68, %78 : vector<8x128xf32>
    %80 = arith.addf %77, %79 : vector<8x128xf32>
    %81 = vector.shape_cast %55 : vector<1x128xf32> to vector<1x128xf32>
    %82 = vector.broadcast %81 : vector<1x128xf32> to vector<8x128xf32>
    %83 = arith.mulf %69, %82 : vector<8x128xf32>
    %84 = arith.addf %80, %83 : vector<8x128xf32>
    %85 = arith.mulf %65, %64 : vector<8x128xf32>
    %c1_i32_42 = arith.constant 1 : i32
    %86 = tpu.dynamic_rotate %85 by %c1_i32_42 dim 0 : vector<8x128xf32>, i32 -> vector<8x128xf32>
    %87 = arith.mulf %66, %86 : vector<8x128xf32>
    %88 = arith.addf %85, %87 : vector<8x128xf32>
    %c2_i32_43 = arith.constant 2 : i32
    %89 = tpu.dynamic_rotate %88 by %c2_i32_43 dim 0 : vector<8x128xf32>, i32 -> vector<8x128xf32>
    %90 = arith.mulf %67, %89 : vector<8x128xf32>
    %91 = arith.addf %88, %90 : vector<8x128xf32>
    %c4_i32_44 = arith.constant 4 : i32
    %92 = tpu.dynamic_rotate %91 by %c4_i32_44 dim 0 : vector<8x128xf32>, i32 -> vector<8x128xf32>
    %93 = arith.mulf %68, %92 : vector<8x128xf32>
    %94 = arith.addf %91, %93 : vector<8x128xf32>
    %95 = vector.shape_cast %56 : vector<1x128xf32> to vector<1x128xf32>
    %96 = vector.broadcast %95 : vector<1x128xf32> to vector<8x128xf32>
    %97 = arith.mulf %69, %96 : vector<8x128xf32>
    %98 = arith.addf %94, %97 : vector<8x128xf32>
    %99 = arith.mulf %64, %70 : vector<8x128xf32>
    %100 = arith.addf %99, %84 : vector<8x128xf32>
    %101 = arith.mulf %63, %70 : vector<8x128xf32>
    %102 = arith.addf %101, %98 : vector<8x128xf32>
    %103 = tpu.reciprocal %102 : vector<8x128xf32> -> vector<8x128xf32>
    %104 = arith.mulf %100, %103 : vector<8x128xf32>
    %105 = arith.index_cast %58 : i32 to index
    %c0_45 = arith.constant 0 : index
    %106 = vector.load %arg6[%105, %c0_45] : memref<32x128xf32, #tpu.memory_space<vmem>>, vector<8x128xf32>
    tpu.vector_store %arg6[%105, %c0_45], %104 {strides = array<i32>} : memref<32x128xf32, #tpu.memory_space<vmem>>, vector<8x128xf32>,
    %107 = vector.extract_strided_slice %84 {offsets = [7, 0], sizes = [1, 128], strides = [1, 1]} : vector<8x128xf32> to vector<1x128xf32>
    %108 = vector.extract_strided_slice %98 {offsets = [7, 0], sizes = [1, 128], strides = [1, 1]} : vector<8x128xf32> to vector<1x128xf32>
    %c2_i32_46 = arith.constant 2 : i32
    %c8_i32_47 = arith.constant 8 : i32
    %109 = arith.muli %c2_i32_46, %c8_i32_47 : i32
    %110 = tpu.assume_multiple %109, 8 : i32
    %111 = arith.index_cast %110 : i32 to index
    %c0_48 = arith.constant 0 : index
    %112 = vector.load %arg4[%111, %c0_48] : memref<32x128xf32, #tpu.memory_space<vmem>>, vector<8x128xf32>
    %113 = arith.index_cast %110 : i32 to index
    %c0_49 = arith.constant 0 : index
    %114 = vector.load %arg5[%113, %c0_49] : memref<32x128xf32, #tpu.memory_space<vmem>>, vector<8x128xf32>
    %115 = math.exp %112 : vector<8x128xf32>
    %116 = arith.mulf %114, %115 : vector<8x128xf32>
    %c0_50 = arith.constant 0 : index
    %c0_51 = arith.constant 0 : index
    %117 = vector.load %arg8[%c0_50, %c0_51] : memref<8x128xf32, #tpu.memory_space<vmem>>, vector<8x128xf32>
    %c0_52 = arith.constant 0 : index
    %c0_53 = arith.constant 0 : index
    %118 = vector.load %arg9[%c0_52, %c0_53] : memref<8x128xf32, #tpu.memory_space<vmem>>, vector<8x128xf32>
    %c0_54 = arith.constant 0 : index
    %c0_55 = arith.constant 0 : index
    %119 = vector.load %arg10[%c0_54, %c0_55] : memref<8x128xf32, #tpu.memory_space<vmem>>, vector<8x128xf32>
    %c0_56 = arith.constant 0 : index
    %c0_57 = arith.constant 0 : index
    %120 = vector.load %arg11[%c0_56, %c0_57] : memref<8x128xf32, #tpu.memory_space<vmem>>, vector<8x128xf32>
    %c0_58 = arith.constant 0 : index
    %c0_59 = arith.constant 0 : index
    %121 = vector.load %arg12[%c0_58, %c0_59] : memref<8x128xf32, #tpu.memory_space<vmem>>, vector<8x128xf32>
    %c0_60 = arith.constant 0 : index
    %c0_61 = arith.constant 0 : index
    %122 = vector.load %arg7[%c0_60, %c0_61] : memref<8x128xf32, #tpu.memory_space<vmem>>, vector<8x128xf32>
    %123 = arith.mulf %117, %115 : vector<8x128xf32>
    %c1_i32_62 = arith.constant 1 : i32
    %124 = tpu.dynamic_rotate %123 by %c1_i32_62 dim 0 : vector<8x128xf32>, i32 -> vector<8x128xf32>
    %125 = arith.mulf %118, %124 : vector<8x128xf32>
    %126 = arith.addf %123, %125 : vector<8x128xf32>
    %c2_i32_63 = arith.constant 2 : i32
    %127 = tpu.dynamic_rotate %126 by %c2_i32_63 dim 0 : vector<8x128xf32>, i32 -> vector<8x128xf32>
    %128 = arith.mulf %119, %127 : vector<8x128xf32>
    %129 = arith.addf %126, %128 : vector<8x128xf32>
    %c4_i32_64 = arith.constant 4 : i32
    %130 = tpu.dynamic_rotate %129 by %c4_i32_64 dim 0 : vector<8x128xf32>, i32 -> vector<8x128xf32>
    %131 = arith.mulf %120, %130 : vector<8x128xf32>
    %132 = arith.addf %129, %131 : vector<8x128xf32>
    %133 = vector.shape_cast %107 : vector<1x128xf32> to vector<1x128xf32>
    %134 = vector.broadcast %133 : vector<1x128xf32> to vector<8x128xf32>
    %135 = arith.mulf %121, %134 : vector<8x128xf32>
    %136 = arith.addf %132, %135 : vector<8x128xf32>
    %137 = arith.mulf %117, %116 : vector<8x128xf32>
    %c1_i32_65 = arith.constant 1 : i32
    %138 = tpu.dynamic_rotate %137 by %c1_i32_65 dim 0 : vector<8x128xf32>, i32 -> vector<8x128xf32>
    %139 = arith.mulf %118, %138 : vector<8x128xf32>
    %140 = arith.addf %137, %139 : vector<8x128xf32>
    %c2_i32_66 = arith.constant 2 : i32
    %141 = tpu.dynamic_rotate %140 by %c2_i32_66 dim 0 : vector<8x128xf32>, i32 -> vector<8x128xf32>
    %142 = arith.mulf %119, %141 : vector<8x128xf32>
    %143 = arith.addf %140, %142 : vector<8x128xf32>
    %c4_i32_67 = arith.constant 4 : i32
    %144 = tpu.dynamic_rotate %143 by %c4_i32_67 dim 0 : vector<8x128xf32>, i32 -> vector<8x128xf32>
    %145 = arith.mulf %120, %144 : vector<8x128xf32>
    %146 = arith.addf %143, %145 : vector<8x128xf32>
    %147 = vector.shape_cast %108 : vector<1x128xf32> to vector<1x128xf32>
    %148 = vector.broadcast %147 : vector<1x128xf32> to vector<8x128xf32>
    %149 = arith.mulf %121, %148 : vector<8x128xf32>
    %150 = arith.addf %146, %149 : vector<8x128xf32>
    %151 = arith.mulf %116, %122 : vector<8x128xf32>
    %152 = arith.addf %151, %136 : vector<8x128xf32>
    %153 = arith.mulf %115, %122 : vector<8x128xf32>
    %154 = arith.addf %153, %150 : vector<8x128xf32>
    %155 = tpu.reciprocal %154 : vector<8x128xf32> -> vector<8x128xf32>
    %156 = arith.mulf %152, %155 : vector<8x128xf32>
    %157 = arith.index_cast %110 : i32 to index
    %c0_68 = arith.constant 0 : index
    %158 = vector.load %arg6[%157, %c0_68] : memref<32x128xf32, #tpu.memory_space<vmem>>, vector<8x128xf32>
    tpu.vector_store %arg6[%157, %c0_68], %156 {strides = array<i32>} : memref<32x128xf32, #tpu.memory_space<vmem>>, vector<8x128xf32>,
    %159 = vector.extract_strided_slice %136 {offsets = [7, 0], sizes = [1, 128], strides = [1, 1]} : vector<8x128xf32> to vector<1x128xf32>
    %160 = vector.extract_strided_slice %150 {offsets = [7, 0], sizes = [1, 128], strides = [1, 1]} : vector<8x128xf32> to vector<1x128xf32>
    %c3_i32 = arith.constant 3 : i32
    %c8_i32_69 = arith.constant 8 : i32
    %161 = arith.muli %c3_i32, %c8_i32_69 : i32
    %162 = tpu.assume_multiple %161, 8 : i32
    %163 = arith.index_cast %162 : i32 to index
    %c0_70 = arith.constant 0 : index
    %164 = vector.load %arg4[%163, %c0_70] : memref<32x128xf32, #tpu.memory_space<vmem>>, vector<8x128xf32>
    %165 = arith.index_cast %162 : i32 to index
    %c0_71 = arith.constant 0 : index
    %166 = vector.load %arg5[%165, %c0_71] : memref<32x128xf32, #tpu.memory_space<vmem>>, vector<8x128xf32>
    %167 = math.exp %164 : vector<8x128xf32>
    %168 = arith.mulf %166, %167 : vector<8x128xf32>
    %c0_72 = arith.constant 0 : index
    %c0_73 = arith.constant 0 : index
    %169 = vector.load %arg8[%c0_72, %c0_73] : memref<8x128xf32, #tpu.memory_space<vmem>>, vector<8x128xf32>
    %c0_74 = arith.constant 0 : index
    %c0_75 = arith.constant 0 : index
    %170 = vector.load %arg9[%c0_74, %c0_75] : memref<8x128xf32, #tpu.memory_space<vmem>>, vector<8x128xf32>
    %c0_76 = arith.constant 0 : index
    %c0_77 = arith.constant 0 : index
    %171 = vector.load %arg10[%c0_76, %c0_77] : memref<8x128xf32, #tpu.memory_space<vmem>>, vector<8x128xf32>
    %c0_78 = arith.constant 0 : index
    %c0_79 = arith.constant 0 : index
    %172 = vector.load %arg11[%c0_78, %c0_79] : memref<8x128xf32, #tpu.memory_space<vmem>>, vector<8x128xf32>
    %c0_80 = arith.constant 0 : index
    %c0_81 = arith.constant 0 : index
    %173 = vector.load %arg12[%c0_80, %c0_81] : memref<8x128xf32, #tpu.memory_space<vmem>>, vector<8x128xf32>
    %c0_82 = arith.constant 0 : index
    %c0_83 = arith.constant 0 : index
    %174 = vector.load %arg7[%c0_82, %c0_83] : memref<8x128xf32, #tpu.memory_space<vmem>>, vector<8x128xf32>
    %175 = arith.mulf %169, %167 : vector<8x128xf32>
    %c1_i32_84 = arith.constant 1 : i32
    %176 = tpu.dynamic_rotate %175 by %c1_i32_84 dim 0 : vector<8x128xf32>, i32 -> vector<8x128xf32>
    %177 = arith.mulf %170, %176 : vector<8x128xf32>
    %178 = arith.addf %175, %177 : vector<8x128xf32>
    %c2_i32_85 = arith.constant 2 : i32
    %179 = tpu.dynamic_rotate %178 by %c2_i32_85 dim 0 : vector<8x128xf32>, i32 -> vector<8x128xf32>
    %180 = arith.mulf %171, %179 : vector<8x128xf32>
    %181 = arith.addf %178, %180 : vector<8x128xf32>
    %c4_i32_86 = arith.constant 4 : i32
    %182 = tpu.dynamic_rotate %181 by %c4_i32_86 dim 0 : vector<8x128xf32>, i32 -> vector<8x128xf32>
    %183 = arith.mulf %172, %182 : vector<8x128xf32>
    %184 = arith.addf %181, %183 : vector<8x128xf32>
    %185 = vector.shape_cast %159 : vector<1x128xf32> to vector<1x128xf32>
    %186 = vector.broadcast %185 : vector<1x128xf32> to vector<8x128xf32>
    %187 = arith.mulf %173, %186 : vector<8x128xf32>
    %188 = arith.addf %184, %187 : vector<8x128xf32>
    %189 = arith.mulf %169, %168 : vector<8x128xf32>
    %c1_i32_87 = arith.constant 1 : i32
    %190 = tpu.dynamic_rotate %189 by %c1_i32_87 dim 0 : vector<8x128xf32>, i32 -> vector<8x128xf32>
    %191 = arith.mulf %170, %190 : vector<8x128xf32>
    %192 = arith.addf %189, %191 : vector<8x128xf32>
    %c2_i32_88 = arith.constant 2 : i32
    %193 = tpu.dynamic_rotate %192 by %c2_i32_88 dim 0 : vector<8x128xf32>, i32 -> vector<8x128xf32>
    %194 = arith.mulf %171, %193 : vector<8x128xf32>
    %195 = arith.addf %192, %194 : vector<8x128xf32>
    %c4_i32_89 = arith.constant 4 : i32
    %196 = tpu.dynamic_rotate %195 by %c4_i32_89 dim 0 : vector<8x128xf32>, i32 -> vector<8x128xf32>
    %197 = arith.mulf %172, %196 : vector<8x128xf32>
    %198 = arith.addf %195, %197 : vector<8x128xf32>
    %199 = vector.shape_cast %160 : vector<1x128xf32> to vector<1x128xf32>
    %200 = vector.broadcast %199 : vector<1x128xf32> to vector<8x128xf32>
    %201 = arith.mulf %173, %200 : vector<8x128xf32>
    %202 = arith.addf %198, %201 : vector<8x128xf32>
    %203 = arith.mulf %168, %174 : vector<8x128xf32>
    %204 = arith.addf %203, %188 : vector<8x128xf32>
    %205 = arith.mulf %167, %174 : vector<8x128xf32>
    %206 = arith.addf %205, %202 : vector<8x128xf32>
    %207 = tpu.reciprocal %206 : vector<8x128xf32> -> vector<8x128xf32>
    %208 = arith.mulf %204, %207 : vector<8x128xf32>
    %209 = arith.index_cast %162 : i32 to index
    %c0_90 = arith.constant 0 : index
    %210 = vector.load %arg6[%209, %c0_90] : memref<32x128xf32, #tpu.memory_space<vmem>>, vector<8x128xf32>
    tpu.vector_store %arg6[%209, %c0_90], %208 {strides = array<i32>} : memref<32x128xf32, #tpu.memory_space<vmem>>, vector<8x128xf32>,
    %211 = vector.extract_strided_slice %188 {offsets = [7, 0], sizes = [1, 128], strides = [1, 1]} : vector<8x128xf32> to vector<1x128xf32>
    %212 = vector.extract_strided_slice %202 {offsets = [7, 0], sizes = [1, 128], strides = [1, 1]} : vector<8x128xf32> to vector<1x128xf32>
    %c4_i32_91 = arith.constant 4 : i32
    %c0_92 = arith.constant 0 : index
    %c0_93 = arith.constant 0 : index
    %213 = vector.load %arg13[%c0_92, %c0_93] : memref<1x128xf32, #tpu.memory_space<vmem>>, vector<1x128xf32>
    tpu.vector_store %arg13[%c0_92, %c0_93], %211 {strides = array<i32>} : memref<1x128xf32, #tpu.memory_space<vmem>>, vector<1x128xf32>,
    %c0_94 = arith.constant 0 : index
    %c0_95 = arith.constant 0 : index
    %214 = vector.load %arg14[%c0_94, %c0_95] : memref<1x128xf32, #tpu.memory_space<vmem>>, vector<1x128xf32>
    tpu.vector_store %arg14[%c0_94, %c0_95], %212 {strides = array<i32>} : memref<1x128xf32, #tpu.memory_space<vmem>>, vector<1x128xf32>,
    return
  }
  func.func @transform_0(%arg0: i32, %arg1: i32) -> (i32, i32) {
    %c0_i32 = arith.constant 0 : i32
    %c0_i32_0 = arith.constant 0 : i32
    return %c0_i32, %arg0 : i32, i32
  }
  func.func @transform_1(%arg0: i32, %arg1: i32) -> (i32, i32) {
    %c0_i32 = arith.constant 0 : i32
    %c0_i32_0 = arith.constant 0 : i32
    return %c0_i32, %arg0 : i32, i32
  }
  func.func @transform_2(%arg0: i32, %arg1: i32) -> (i32, i32) {
    %c0_i32 = arith.constant 0 : i32
    return %arg1, %arg0 : i32, i32
  }
  func.func @transform_3(%arg0: i32, %arg1: i32) -> (i32, i32) {
    %c0_i32 = arith.constant 0 : i32
    return %arg1, %arg0 : i32, i32
  }
  func.func @transform_4(%arg0: i32, %arg1: i32) -> (i32, i32) {
    %c0_i32 = arith.constant 0 : i32
    return %arg1, %arg0 : i32, i32
  }
}

</mosaic_0001>

<llo_original>
// kernel: tpu_custom_call.1
$region0: #{tpu_custom_call.1}
  #allocation0 [shape = 'u32[]', space=smem, size = 0x4, offset = 0x4, fixed_abs, tag = 'smem constant byte address 0x4 - core index']
  #allocation1 [shape = 'u32[144,128]{1,0:T(1,128)}', space=vmem, size = 0x12000, scoped, tag = 'internal scratch']
  #allocation2 [shape = 'f32[8,128]{1,0:T(8,128)}', space=vmem, size = 0x1000, scoped, tag = 'scratch operand']
  #allocation3 [shape = 'f32[8,128]{1,0:T(8,128)}', space=vmem, size = 0x1000, scoped, tag = 'scratch operand']
  #allocation4 [shape = 'f32[8,128]{1,0:T(8,128)}', space=vmem, size = 0x1000, scoped, tag = 'scratch operand']
  #allocation5 [shape = 'f32[8,128]{1,0:T(8,128)}', space=vmem, size = 0x1000, scoped, tag = 'scratch operand']
  #allocation6 [shape = 'f32[8,128]{1,0:T(8,128)}', space=vmem, size = 0x1000, scoped, tag = 'scratch operand']
  #allocation7 [shape = 'f32[8,128]{1,0:T(8,128)}', space=vmem, size = 0x1000, scoped, tag = 'scratch operand']
  #allocation8 [shape = 'f32[1,128]{1,0:T(1,128)}', space=vmem, size = 0x200, scoped, tag = 'scratch operand']
  #allocation9 [shape = 'f32[1,128]{1,0:T(1,128)}', space=vmem, size = 0x200, scoped, tag = 'scratch operand']
  %s0 = inlined_call_operand.hbm [shape: f32[1,256], index: 0, kind: input, shape index: {}]
  %s1 = inlined_call_operand.vmem [shape: f32[1,256], index: 1, kind: input, shape index: {}]
  %s2 = inlined_call_operand.hbm [shape: f32[64,256], index: 2, kind: input, shape index: {}]
  %s3 = inlined_call_operand.hbm [shape: f32[64,256], index: 3, kind: input, shape index: {}]
  %s4 = inlined_call_operand.hbm [shape: f32[64,256], index: 4, kind: output, shape index: {}]
  %s5 = sld [smem:[#allocation0]]
  $region65: #{tpu_custom_call.1} parent=0
    _
  %s7 = ssub.s32 1, %s5
  %s8 = scalar_select 0, %s7, %s5
  $region1: #{tpu_custom_call.1} parent=0
    #allocation10 [shape = 'u8[1024]{0}', space=vmem, size = 0x400, scoped, tag = 'input window, operand 0']
    #allocation11 [shape = 's32[2]{0}', space=sflag, size = 0x8, scoped, tag = 'scoped memory for tpu_custom_call.1']
    #allocation12 [shape = 's32[2]{0}', space=sflag, size = 0x8, scoped, tag = 'scoped memory for tpu_custom_call.1']
    #allocation13 [shape = 'u8[32768]{0}', space=vmem, size = 0x8000, scoped, tag = 'input window, operand 2']
    #allocation14 [shape = 's32[2]{0}', space=sflag, size = 0x8, scoped, tag = 'scoped memory for tpu_custom_call.1']
    #allocation15 [shape = 'u8[32768]{0}', space=vmem, size = 0x8000, scoped, tag = 'input window, operand 3']
    #allocation16 [shape = 'u8[32768]{0}', space=vmem, size = 0x8000, scoped, tag = 'output window, operand 0']
    %9 = vsyncpa [#allocation11], 0
    %s10 = scalar_lea.sflag [#allocation11], 1
    %11 = vsyncpa %s10, 0
    %12 = vsyncpa [#allocation14], 0
    %s13 = scalar_lea.sflag [#allocation14], 1
    %14 = vsyncpa %s13, 0
    %15 = vsyncpa [#allocation12], 0
    %s16 = scalar_lea.sflag [#allocation12], 1
    %17 = vsyncpa %s16, 0
    loop: start=0, step=1, limit=6
    $region2: #{tpu_custom_call.1} parent=1 // loop_pre_header
      _
    $region3: #{tpu_custom_call.1} parent=1 // loop_header
      %s19 = sphi 0, %s23
      %p20 = scmp.ge.s32.totalorder %s19, 6
      %s26 = sphi 0, %s38
      %s27 = sphi 0, %s34
      %s28 = sphi 0, %s26
      %s29 = sphi 0, %s27
      %s30 = sphi 0, %s28
      %s31 = sphi 0, %s29
      %s41 = sphi 0, %s43
      %s44 = sphi 0, %s41
      %s45 = sphi 0, %s44
      %s61 = sphi 0, %s45
      %s67 = sphi 0, %s69
      %s70 = sphi 0, %s67
      %s71 = sphi 0, %s70
      %s87 = sphi 0, %s71
      %s95 = sphi 0, %s97
      %s98 = sphi 0, %s95
      %s99 = sphi 0, %s98
      %s115 = sphi 0, %s99
      %s123 = sphi 0, %s125
      %s126 = sphi 0, %s123
      %s127 = sphi 0, %s126
      %s143 = sphi 0, %s127
      %s151 = sphi 0, %s153
      %s154 = sphi 0, %s151
      %s155 = sphi 0, %s154
      %s171 = sphi 0, %s155
    $region4: #{tpu_custom_call.1} parent=1 // loop_header_branch
      %22 = sbr.rel (%p20) target = $region8
    $region5: #{tpu_custom_call.1} parent=1 // loop_body
      %s24 = ssub.s32 %s19, 1
      %s25 = ssub.s32 %s19, 2
      %s32 = sadd.s32 1, %s27
      %p33 = scmp.ge.s32.totalorder %s32, 2
      %s34 = scalar_select %p33, 0, %s32
      %s35 = sadd.s32 1, %s26
      %s36 = scalar_select %p33, %s35, %s26
      %p37 = scmp.ge.s32.totalorder %s36, 2
      %s38 = scalar_select %p37, 0, %s36
      %s39 = ssub.s32 %s26, %s38
      %p40 = scmp.eq.s32.totalorder %s39, 0
      %s42 = sadd.s32 %s41, 1
      %s43 = scalar_select %p40, %s41, %s42
      %p46 = pneg %p40
      %p47 = scmp.eq.s32.totalorder %s19, 3
      %p48 = por %p46, %p47
      %p49 = scmp.ne.s32.totalorder %s41, %s44
      %p50 = scmp.eq.s32.totalorder %s19, 0
      %p51 = por %p49, %p50
      %p52 = scmp.ne.s32.totalorder %s41, %s44
      %p53 = scmp.eq.s32.totalorder %s24, 3
      %p54 = por %p52, %p53
      %p55 = scmp.ne.s32.totalorder %s44, %s45
      %p56 = scmp.eq.s32.totalorder %s24, 0
      %p57 = por %p55, %p56
      %p58 = scmp.ne.s32.totalorder %s44, %s45
      %p59 = scmp.eq.s32.totalorder %s25, 3
      %p60 = por %p58, %p59
      %p62 = scmp.ne.s32.totalorder %s45, %s61
      %p63 = scmp.eq.s32.totalorder %s25, 0
      %p64 = por %p62, %p63
      %s65 = ssub.s32 %s26, %s38
      %p66 = scmp.eq.s32.totalorder %s65, 0
      %s68 = sadd.s32 %s67, 1
      %s69 = scalar_select %p66, %s67, %s68
      %p72 = pneg %p66
      %p73 = scmp.eq.s32.totalorder %s19, 3
      %p74 = por %p72, %p73
      %p75 = scmp.ne.s32.totalorder %s67, %s70
      %p76 = scmp.eq.s32.totalorder %s19, 0
      %p77 = por %p75, %p76
      %p78 = scmp.ne.s32.totalorder %s67, %s70
      %p79 = scmp.eq.s32.totalorder %s24, 3
      %p80 = por %p78, %p79
      %p81 = scmp.ne.s32.totalorder %s70, %s71
      %p82 = scmp.eq.s32.totalorder %s24, 0
      %p83 = por %p81, %p82
      %p84 = scmp.ne.s32.totalorder %s70, %s71
      %p85 = scmp.eq.s32.totalorder %s25, 3
      %p86 = por %p84, %p85
      %p88 = scmp.ne.s32.totalorder %s71, %s87
      %p89 = scmp.eq.s32.totalorder %s25, 0
      %p90 = por %p88, %p89
      %s91 = ssub.s32 %s27, %s34
      %s92 = ssub.s32 %s26, %s38
      %s93 = sor.u32 %s91, %s92
      %p94 = scmp.eq.s32.totalorder %s93, 0
      %s96 = sadd.s32 %s95, 1
      %s97 = scalar_select %p94, %s95, %s96
      %p100 = pneg %p94
      %p101 = scmp.eq.s32.totalorder %s19, 3
      %p102 = por %p100, %p101
      %p103 = scmp.ne.s32.totalorder %s95, %s98
      %p104 = scmp.eq.s32.totalorder %s19, 0
      %p105 = por %p103, %p104
      %p106 = scmp.ne.s32.totalorder %s95, %s98
      %p107 = scmp.eq.s32.totalorder %s24, 3
      %p108 = por %p106, %p107
      %p109 = scmp.ne.s32.totalorder %s98, %s99
      %p110 = scmp.eq.s32.totalorder %s24, 0
      %p111 = por %p109, %p110
      %p112 = scmp.ne.s32.totalorder %s98, %s99
      %p113 = scmp.eq.s32.totalorder %s25, 3
      %p114 = por %p112, %p113
      %p116 = scmp.ne.s32.totalorder %s99, %s115
      %p117 = scmp.eq.s32.totalorder %s25, 0
      %p118 = por %p116, %p117
      %s119 = ssub.s32 %s27, %s34
      %s120 = ssub.s32 %s26, %s38
      %s121 = sor.u32 %s119, %s120
      %p122 = scmp.eq.s32.totalorder %s121, 0
      %s124 = sadd.s32 %s123, 1
      %s125 = scalar_select %p122, %s123, %s124
      %p128 = pneg %p122
      %p129 = scmp.eq.s32.totalorder %s19, 3
      %p130 = por %p128, %p129
      %p131 = scmp.ne.s32.totalorder %s123, %s126
      %p132 = scmp.eq.s32.totalorder %s19, 0
      %p133 = por %p131, %p132
      %p134 = scmp.ne.s32.totalorder %s123, %s126
      %p135 = scmp.eq.s32.totalorder %s24, 3
      %p136 = por %p134, %p135
      %p137 = scmp.ne.s32.totalorder %s126, %s127
      %p138 = scmp.eq.s32.totalorder %s24, 0
      %p139 = por %p137, %p138
      %p140 = scmp.ne.s32.totalorder %s126, %s127
      %p141 = scmp.eq.s32.totalorder %s25, 3
      %p142 = por %p140, %p141
      %p144 = scmp.ne.s32.totalorder %s127, %s143
      %p145 = scmp.eq.s32.totalorder %s25, 0
      %p146 = por %p144, %p145
      %s147 = ssub.s32 %s27, %s34
      %s148 = ssub.s32 %s26, %s38
      %s149 = sor.u32 %s147, %s148
      %p150 = scmp.eq.s32.totalorder %s149, 0
      %s152 = sadd.s32 %s151, 1
      %s153 = scalar_select %p150, %s151, %s152
      %p156 = pneg %p150
      %p157 = scmp.eq.s32.totalorder %s19, 3
      %p158 = por %p156, %p157
      %p159 = scmp.ne.s32.totalorder %s151, %s154
      %p160 = scmp.eq.s32.totalorder %s19, 0
      %p161 = por %p159, %p160
      %p162 = scmp.ne.s32.totalorder %s151, %s154
      %p163 = scmp.eq.s32.totalorder %s24, 3
      %p164 = por %p162, %p163
      %p165 = scmp.ne.s32.totalorder %s154, %s155
      %p166 = scmp.eq.s32.totalorder %s24, 0
      %p167 = por %p165, %p166
      %p168 = scmp.ne.s32.totalorder %s154, %s155
      %p169 = scmp.eq.s32.totalorder %s25, 3
      %p170 = por %p168, %p169
      %p172 = scmp.ne.s32.totalorder %s155, %s171
      %p173 = scmp.eq.s32.totalorder %s25, 0
      %p174 = por %p172, %p173
      %p175 = scmp.le.s32.totalorder 1, %s19
      %p176 = scmp.lt.s32.totalorder %s19, 5
      %p177 = pnand %p175, %p176
      %p178 = pneg %p177
      // Predicated region
      $region9: #{tpu_custom_call.1} parent=5 // pred_check
        _
      $region10: #{tpu_custom_call.1} parent=5 // pred_check_branch
        %180 = sbr.rel (%p177) target = $region12
      $region11: #{tpu_custom_call.1} parent=5 // pred_region
        %s181 = ssub.s32 %s19, 1
      $region12: #{tpu_custom_call.1} parent=5 // pred_fallthru
        _
      %p182 = scmp.lt.s32.totalorder %s19, 4
      // Predicated region
      $region13: #{tpu_custom_call.1} parent=5 // pred_check
        %p183 = pneg %p182
      $region14: #{tpu_custom_call.1} parent=5 // pred_check_branch
        %185 = sbr.rel (%p183) target = $region16
      $region15: #{tpu_custom_call.1} parent=5 // pred_region
        // Predicated region
        $region17: #{tpu_custom_call.1} parent=15 // pred_check
          %p186 = pneg %p51
        $region18: #{tpu_custom_call.1} parent=15 // pred_check_branch
          %188 = sbr.rel (%p186) target = $region20
        $region19: #{tpu_custom_call.1} parent=15 // pred_region
          %s189 = sand.u32 %s41, 1
          %s190 = scalar_lea.sflag [#allocation11], %s189
          %s191 = sand.u32 %s41, 1
          %s192 = scalar_lea.vmem [#allocation10], %s191
          %s194 = ssub.s32 16, 16
          %195 = vsyncadd %s190, %s194
          %s196 = smul.addr %s26, 16
          %s197 = scalar_lea.hbm %s0, %s196
          %s199 = sshll.u32 %s192, 4
          %s200 = int_to_ptr.vmem [resolvable:$true] %s199
          %202 = dma.hbm_to_vmem [thread:$0]  %s197, 16, %s200, %s190
        $region20: #{tpu_custom_call.1} parent=15 // pred_fallthru
          _
        // Predicated region
        $region21: #{tpu_custom_call.1} parent=15 // pred_check
          %p203 = pneg %p77
        $region22: #{tpu_custom_call.1} parent=15 // pred_check_branch
          %205 = sbr.rel (%p203) target = $region24
        $region23: #{tpu_custom_call.1} parent=15 // pred_region
          %p206 = scmp.lt.s32.totalorder %s26, 1
          %s207 = scalar_select %p206, %s26, 1
          %s208 = scalar_lea.vmem %s1, %s207
        $region24: #{tpu_custom_call.1} parent=15 // pred_fallthru
          _
        // Predicated region
        $region25: #{tpu_custom_call.1} parent=15 // pred_check
          %p209 = pneg %p105
        $region26: #{tpu_custom_call.1} parent=15 // pred_check_branch
          %211 = sbr.rel (%p209) target = $region28
        $region27: #{tpu_custom_call.1} parent=15 // pred_region
          %s212 = sand.u32 %s19, 1
          %s213 = scalar_lea.sflag [#allocation14], %s212
          %s214 = sand.u32 %s95, 1
          %s215 = smul.addr %s214, 32
          %s216 = scalar_lea.vmem [#allocation13], %s215
          %s217 = smul.u32 4, %s27
          %s219 = ssub.s32 512, 512
          %220 = vsyncadd %s213, %s219
          %s221 = smul.addr %s217, 2
          %s222 = sadd.s32 %s26, %s221
          %s223 = smul.addr %s222, 128
          %s224 = scalar_lea.hbm %s2, %s223
          %s225 = sshll.u32 %s216, 4
          %s226 = int_to_ptr.vmem [resolvable:$true] %s225
          %231 = dma.hbm_to_vmem [thread:$0]  %s224, 512, %s226, %s213, 256, 128, 8
        $region28: #{tpu_custom_call.1} parent=15 // pred_fallthru
          _
        // Predicated region
        $region29: #{tpu_custom_call.1} parent=15 // pred_check
          %p232 = pneg %p133
        $region30: #{tpu_custom_call.1} parent=15 // pred_check_branch
          %234 = sbr.rel (%p232) target = $region32
        $region31: #{tpu_custom_call.1} parent=15 // pred_region
          %s235 = sand.u32 %s19, 1
          %s236 = scalar_lea.sflag [#allocation14], %s235
          %s237 = sand.u32 %s123, 1
          %s238 = smul.addr %s237, 32
          %s239 = scalar_lea.vmem [#allocation15], %s238
          %s240 = smul.u32 4, %s27
          %s242 = ssub.s32 512, 512
          %243 = vsyncadd %s236, %s242
          %s244 = smul.addr %s240, 2
          %s245 = sadd.s32 %s26, %s244
          %s246 = smul.addr %s245, 128
          %s247 = scalar_lea.hbm %s3, %s246
          %s248 = sshll.u32 %s239, 4
          %s249 = int_to_ptr.vmem [resolvable:$true] %s248
          %254 = dma.hbm_to_vmem [thread:$0]  %s247, 512, %s249, %s236, 256, 128, 8
        $region32: #{tpu_custom_call.1} parent=15 // pred_fallthru
          _
      $region16: #{tpu_custom_call.1} parent=5 // pred_fallthru
        _
      %p255 = scmp.le.s32.totalorder 1, %s19
      %p256 = scmp.lt.s32.totalorder %s19, 5
      %p257 = pnand %p255, %p256
      %p258 = pneg %p257
      // Predicated region
      $region33: #{tpu_custom_call.1} parent=5 // pred_check
        _
      $region34: #{tpu_custom_call.1} parent=5 // pred_check_branch
        %260 = sbr.rel (%p257) target = $region36
      $region35: #{tpu_custom_call.1} parent=5 // pred_region
        %s261 = ssub.s32 %s19, 1
        %s262 = sand.u32 %s44, 1
        %s263 = scalar_lea.sflag [#allocation11], %s262
        %s264 = sand.u32 %s44, 1
        %s265 = scalar_lea.vmem [#allocation10], %s264
        // Predicated region
        $region37: #{tpu_custom_call.1} parent=35 // pred_check
          %p266 = pneg %p57
        $region38: #{tpu_custom_call.1} parent=35 // pred_check_branch
          %268 = sbr.rel (%p266) target = $region40
        $region39: #{tpu_custom_call.1} parent=35 // pred_region
          %269 = dma.done %s263, 16
        $region40: #{tpu_custom_call.1} parent=35 // pred_fallthru
          _
        %s270 = sand.u32 %s24, 1
        %s271 = scalar_lea.sflag [#allocation14], %s270
        %s272 = sand.u32 %s98, 1
        %s273 = smul.addr %s272, 32
        %s274 = scalar_lea.vmem [#allocation13], %s273
        // Predicated region
        $region41: #{tpu_custom_call.1} parent=35 // pred_check
          %p275 = pneg %p111
        $region42: #{tpu_custom_call.1} parent=35 // pred_check_branch
          %277 = sbr.rel (%p275) target = $region44
        $region43: #{tpu_custom_call.1} parent=35 // pred_region
          %278 = dma.done %s271, 512
        $region44: #{tpu_custom_call.1} parent=35 // pred_fallthru
          _
        %s279 = sand.u32 %s24, 1
        %s280 = scalar_lea.sflag [#allocation14], %s279
        %s281 = sand.u32 %s126, 1
        %s282 = smul.addr %s281, 32
        %s283 = scalar_lea.vmem [#allocation15], %s282
        // Predicated region
        $region45: #{tpu_custom_call.1} parent=35 // pred_check
          %p284 = pneg %p139
        $region46: #{tpu_custom_call.1} parent=35 // pred_check_branch
          %286 = sbr.rel (%p284) target = $region48
        $region47: #{tpu_custom_call.1} parent=35 // pred_region
          %287 = dma.done %s280, 512
        $region48: #{tpu_custom_call.1} parent=35 // pred_fallthru
          _
        %s288 = sand.u32 %s44, 1
        %s289 = scalar_lea.sflag [#allocation11], %s288
        %s290 = sand.u32 %s44, 1
        %s291 = scalar_lea.vmem [#allocation10], %s290
        %p292 = pneg %p57
        %p293 = pneg %p54
        %p294 = scmp.lt.s32.totalorder %s28, 1
        %s295 = scalar_select %p294, %s28, 1
        %s296 = scalar_lea.vmem %s1, %s295
        %p297 = pneg %p83
        %p298 = pneg %p80
        %s299 = sand.u32 %s24, 1
        %s300 = scalar_lea.sflag [#allocation14], %s299
        %s301 = sand.u32 %s98, 1
        %s302 = smul.addr %s301, 32
        %s303 = scalar_lea.vmem [#allocation13], %s302
        %p304 = pneg %p111
        %p305 = pneg %p108
        %s306 = sand.u32 %s24, 1
        %s307 = scalar_lea.sflag [#allocation14], %s306
        %s308 = sand.u32 %s126, 1
        %s309 = smul.addr %s308, 32
        %s310 = scalar_lea.vmem [#allocation15], %s309
        %p311 = pneg %p139
        %p312 = pneg %p136
        %p313 = pneg %p167
        %p314 = pneg %p164
        %s315 = sand.u32 %s154, 1
        %s316 = scalar_lea.sflag [#allocation12], %s315
        %s317 = sand.u32 %s154, 1
        %s318 = smul.addr %s317, 32
        %s319 = scalar_lea.vmem [#allocation16], %s318
        %p320 = scmp.lt.s32.totalorder %s28, 1
        %s321 = scalar_select %p320, %s28, 1
        %s322 = scalar_lea.vmem %s1, %s321
        %s323 = smul.u32 4, %s29
        %s324 = smul.u32 4, %s29
        %s325 = smul.u32 4, %s29
        %p326 = scmp.eq.s32.totalorder %s29, 0
        // Predicated region
        $region49: #{tpu_custom_call.1} parent=35 // pred_check
          %p327 = pneg %p326
        $region50: #{tpu_custom_call.1} parent=35 // pred_check_branch
          %329 = sbr.rel (%p327) target = $region52
        $region51: #{tpu_custom_call.1} parent=35 // pred_region
          %v330 = vld [vmem:[%s265] sm:$0x1]
          %v331 = vld [vmem:[%s322] sm:$0x1]
          %v332 = vmul.f32 %v330, 1.442695
          %v333 = vpow.pop %v332
          %v334 = vmul.f32 %v333, %v333
          %v335 = vmul.f32 %v334, %v334
          %v336 = vlaneseq
          %v337 = vshrl.u32 %v336, 7
          %v338 = vmul.f32 %v331, 1.442695
          %v339 = vpow.pop %v338
          %v341 = vlaneseq
          %v342 = vshrl.u32 %v341, 7
          %v343 = vsub.s32 0, %v342
          %v344 = vrot.slane %v339, %v343
          %346 = vst [vmem:[#allocation2] sm:$0xff] %v344
          %v348 = vlaneseq
          %v349 = vshrl.u32 %v348, 7
          %v350 = vsub.s32 0, %v349
          %v351 = vrot.slane %v333, %v350
          %353 = vst [vmem:[#allocation3] sm:$0xff] %v351
          %vm354 = vcmp.ge.s32.totalorder %v337, 1
          %v355 = vsel %vm354, %v351, 0.0
          %356 = vst [vmem:[#allocation4] sm:$0xff] %v355
          %vm357 = vcmp.ge.s32.totalorder %v337, 2
          %v359 = vlaneseq
          %v360 = vshrl.u32 %v359, 7
          %v361 = vsub.s32 0, %v360
          %v362 = vrot.slane %v334, %v361
          %v364 = vsel %vm357, %v362, 0.0
          %365 = vst [vmem:[#allocation5] sm:$0xff] %v364
          %vm366 = vcmp.ge.s32.totalorder %v337, 4
          %v368 = vlaneseq
          %v369 = vshrl.u32 %v368, 7
          %v370 = vsub.s32 0, %v369
          %v371 = vrot.slane %v335, %v370
          %v373 = vsel %vm366, %v371, 0.0
          %374 = vst [vmem:[#allocation6] sm:$0xff] %v373
          %v375 = vadd.s32 %v337, 1
          %v376 = vcvt.s32.f32 %v375
          %v378 = vlaneseq
          %v379 = vshrl.u32 %v378, 7
          %v380 = vsub.s32 0, %v379
          %v381 = vrot.slane %v330, %v380
          %v383 = vmul.f32 %v381, %v376
          %v384 = vmul.f32 %v383, 1.442695
          %v385 = vpow.pop %v384
          %386 = vst [vmem:[#allocation7] sm:$0xff] %v385
          %387 = vst [vmem:[#allocation8] sm:$0x1] 0.0
          %388 = vst [vmem:[#allocation9] sm:$0x1] 0.0
        $region52: #{tpu_custom_call.1} parent=35 // pred_fallthru
          _
        %v389 = vld [vmem:[#allocation8] sm:$0x1]
        %v390 = vld [vmem:[#allocation9] sm:$0x1]
        %v391 = vld [vmem:[%s274] sm:$0xff]
        %v392 = vld [vmem:[%s283] sm:$0xff]
        %v393 = vmul.f32 %v391, 1.442695
        %v394 = vpow.pop %v393
        %v395 = vmul.f32 %v392, %v394
        %v396 = vld [vmem:[#allocation3] sm:$0xff]
        %v397 = vld [vmem:[#allocation4] sm:$0xff]
        %v398 = vld [vmem:[#allocation5] sm:$0xff]
        %v399 = vld [vmem:[#allocation6] sm:$0xff]
        %v400 = vld [vmem:[#allocation7] sm:$0xff]
        %v401 = vld [vmem:[#allocation2] sm:$0xff]
        %v402 = vmul.f32 %v396, %v394
        %v403 = vrot.slane %v402, 7
        %v404 = vmul.f32 %v397, %v403
        %v405 = vadd.f32 %v402, %v404
        %v406 = vrot.slane %v405, 6
        %v407 = vmul.f32 %v398, %v406
        %v408 = vadd.f32 %v405, %v407
        %v409 = vrot.slane %v408, 4
        %v410 = vmul.f32 %v399, %v409
        %v411 = vadd.f32 %v408, %v410
        %v413 = vlaneseq
        %v414 = vshrl.u32 %v413, 7
        %v415 = vsub.s32 0, %v414
        %v416 = vrot.slane %v389, %v415
        %v418 = vmul.f32 %v400, %v416
        %v419 = vadd.f32 %v411, %v418
        %v420 = vmul.f32 %v396, %v395
        %v421 = vrot.slane %v420, 7
        %v422 = vmul.f32 %v397, %v421
        %v423 = vadd.f32 %v420, %v422
        %v424 = vrot.slane %v423, 6
        %v425 = vmul.f32 %v398, %v424
        %v426 = vadd.f32 %v423, %v425
        %v427 = vrot.slane %v426, 4
        %v428 = vmul.f32 %v399, %v427
        %v429 = vadd.f32 %v426, %v428
        %v431 = vlaneseq
        %v432 = vshrl.u32 %v431, 7
        %v433 = vsub.s32 0, %v432
        %v434 = vrot.slane %v390, %v433
        %v436 = vmul.f32 %v400, %v434
        %v437 = vadd.f32 %v429, %v436
        %v438 = vmul.f32 %v395, %v401
        %v439 = vadd.f32 %v438, %v419
        %v440 = vmul.f32 %v394, %v401
        %v441 = vadd.f32 %v440, %v437
        %v442 = vrcp.pop %v441
        %v443 = vmul.f32 %v439, %v442
        %444 = vst [vmem:[%s319] sm:$0xff] %v443
        %s445 = scalar_lea.vmem %s274, 8 [#allocation13]
        %v446 = vld [vmem:[%s445] sm:$0xff]
        %s447 = scalar_lea.vmem %s283, 8 [#allocation15]
        %v448 = vld [vmem:[%s447] sm:$0xff]
        %v449 = vmul.f32 %v446, 1.442695
        %v450 = vpow.pop %v449
        %v451 = vmul.f32 %v448, %v450
        %v452 = vld [vmem:[#allocation3] sm:$0xff]
        %v453 = vld [vmem:[#allocation4] sm:$0xff]
        %v454 = vld [vmem:[#allocation5] sm:$0xff]
        %v455 = vld [vmem:[#allocation6] sm:$0xff]
        %v456 = vld [vmem:[#allocation7] sm:$0xff]
        %v457 = vld [vmem:[#allocation2] sm:$0xff]
        %v458 = vmul.f32 %v452, %v450
        %v459 = vrot.slane %v458, 7
        %v460 = vmul.f32 %v453, %v459
        %v461 = vadd.f32 %v458, %v460
        %v462 = vrot.slane %v461, 6
        %v463 = vmul.f32 %v454, %v462
        %v464 = vadd.f32 %v461, %v463
        %v465 = vrot.slane %v464, 4
        %v466 = vmul.f32 %v455, %v465
        %v467 = vadd.f32 %v464, %v466
        %v468 = vlaneseq
        %v469 = vshrl.u32 %v468, 7
        %v470 = vsub.s32 7, %v469
        %v471 = vrot.slane %v419, %v470
        %v472 = vmul.f32 %v456, %v471
        %v473 = vadd.f32 %v467, %v472
        %v474 = vmul.f32 %v452, %v451
        %v475 = vrot.slane %v474, 7
        %v476 = vmul.f32 %v453, %v475
        %v477 = vadd.f32 %v474, %v476
        %v478 = vrot.slane %v477, 6
        %v479 = vmul.f32 %v454, %v478
        %v480 = vadd.f32 %v477, %v479
        %v481 = vrot.slane %v480, 4
        %v482 = vmul.f32 %v455, %v481
        %v483 = vadd.f32 %v480, %v482
        %v484 = vlaneseq
        %v485 = vshrl.u32 %v484, 7
        %v486 = vsub.s32 7, %v485
        %v487 = vrot.slane %v437, %v486
        %v488 = vmul.f32 %v456, %v487
        %v489 = vadd.f32 %v483, %v488
        %v490 = vmul.f32 %v451, %v457
        %v491 = vadd.f32 %v490, %v473
        %v492 = vmul.f32 %v450, %v457
        %v493 = vadd.f32 %v492, %v489
        %v494 = vrcp.pop %v493
        %v495 = vmul.f32 %v491, %v494
        %s496 = scalar_lea.vmem %s319, 8 [#allocation16]
        %497 = vst [vmem:[%s496] sm:$0xff] %v495
        %s498 = scalar_lea.vmem %s274, 16 [#allocation13]
        %v499 = vld [vmem:[%s498] sm:$0xff]
        %s500 = scalar_lea.vmem %s283, 16 [#allocation15]
        %v501 = vld [vmem:[%s500] sm:$0xff]
        %v502 = vmul.f32 %v499, 1.442695
        %v503 = vpow.pop %v502
        %v504 = vmul.f32 %v501, %v503
        %v505 = vld [vmem:[#allocation3] sm:$0xff]
        %v506 = vld [vmem:[#allocation4] sm:$0xff]
        %v507 = vld [vmem:[#allocation5] sm:$0xff]
        %v508 = vld [vmem:[#allocation6] sm:$0xff]
        %v509 = vld [vmem:[#allocation7] sm:$0xff]
        %v510 = vld [vmem:[#allocation2] sm:$0xff]
        %v511 = vmul.f32 %v505, %v503
        %v512 = vrot.slane %v511, 7
        %v513 = vmul.f32 %v506, %v512
        %v514 = vadd.f32 %v511, %v513
        %v515 = vrot.slane %v514, 6
        %v516 = vmul.f32 %v507, %v515
        %v517 = vadd.f32 %v514, %v516
        %v518 = vrot.slane %v517, 4
        %v519 = vmul.f32 %v508, %v518
        %v520 = vadd.f32 %v517, %v519
        %v521 = vlaneseq
        %v522 = vshrl.u32 %v521, 7
        %v523 = vsub.s32 7, %v522
        %v524 = vrot.slane %v473, %v523
        %v525 = vmul.f32 %v509, %v524
        %v526 = vadd.f32 %v520, %v525
        %v527 = vmul.f32 %v505, %v504
        %v528 = vrot.slane %v527, 7
        %v529 = vmul.f32 %v506, %v528
        %v530 = vadd.f32 %v527, %v529
        %v531 = vrot.slane %v530, 6
        %v532 = vmul.f32 %v507, %v531
        %v533 = vadd.f32 %v530, %v532
        %v534 = vrot.slane %v533, 4
        %v535 = vmul.f32 %v508, %v534
        %v536 = vadd.f32 %v533, %v535
        %v537 = vlaneseq
        %v538 = vshrl.u32 %v537, 7
        %v539 = vsub.s32 7, %v538
        %v540 = vrot.slane %v489, %v539
        %v541 = vmul.f32 %v509, %v540
        %v542 = vadd.f32 %v536, %v541
        %v543 = vmul.f32 %v504, %v510
        %v544 = vadd.f32 %v543, %v526
        %v545 = vmul.f32 %v503, %v510
        %v546 = vadd.f32 %v545, %v542
        %v547 = vrcp.pop %v546
        %v548 = vmul.f32 %v544, %v547
        %s549 = scalar_lea.vmem %s319, 16 [#allocation16]
        %550 = vst [vmem:[%s549] sm:$0xff] %v548
        %s551 = scalar_lea.vmem %s274, 24 [#allocation13]
        %v552 = vld [vmem:[%s551] sm:$0xff]
        %s553 = scalar_lea.vmem %s283, 24 [#allocation15]
        %v554 = vld [vmem:[%s553] sm:$0xff]
        %v555 = vmul.f32 %v552, 1.442695
        %v556 = vpow.pop %v555
        %v557 = vmul.f32 %v554, %v556
        %v558 = vld [vmem:[#allocation3] sm:$0xff]
        %v559 = vld [vmem:[#allocation4] sm:$0xff]
        %v560 = vld [vmem:[#allocation5] sm:$0xff]
        %v561 = vld [vmem:[#allocation6] sm:$0xff]
        %v562 = vld [vmem:[#allocation7] sm:$0xff]
        %v563 = vld [vmem:[#allocation2] sm:$0xff]
        %v564 = vmul.f32 %v558, %v556
        %v565 = vrot.slane %v564, 7
        %v566 = vmul.f32 %v559, %v565
        %v567 = vadd.f32 %v564, %v566
        %v568 = vrot.slane %v567, 6
        %v569 = vmul.f32 %v560, %v568
        %v570 = vadd.f32 %v567, %v569
        %v571 = vrot.slane %v570, 4
        %v572 = vmul.f32 %v561, %v571
        %v573 = vadd.f32 %v570, %v572
        %v574 = vlaneseq
        %v575 = vshrl.u32 %v574, 7
        %v576 = vsub.s32 7, %v575
        %v577 = vrot.slane %v526, %v576
        %v578 = vmul.f32 %v562, %v577
        %v579 = vadd.f32 %v573, %v578
        %v580 = vmul.f32 %v558, %v557
        %v581 = vrot.slane %v580, 7
        %v582 = vmul.f32 %v559, %v581
        %v583 = vadd.f32 %v580, %v582
        %v584 = vrot.slane %v583, 6
        %v585 = vmul.f32 %v560, %v584
        %v586 = vadd.f32 %v583, %v585
        %v587 = vrot.slane %v586, 4
        %v588 = vmul.f32 %v561, %v587
        %v589 = vadd.f32 %v586, %v588
        %v590 = vlaneseq
        %v591 = vshrl.u32 %v590, 7
        %v592 = vsub.s32 7, %v591
        %v593 = vrot.slane %v542, %v592
        %v594 = vmul.f32 %v562, %v593
        %v595 = vadd.f32 %v589, %v594
        %v596 = vmul.f32 %v557, %v563
        %v597 = vadd.f32 %v596, %v579
        %v598 = vmul.f32 %v556, %v563
        %v599 = vadd.f32 %v598, %v595
        %v600 = vrcp.pop %v599
        %v601 = vmul.f32 %v597, %v600
        %s602 = scalar_lea.vmem %s319, 24 [#allocation16]
        %603 = vst [vmem:[%s602] sm:$0xff] %v601
        %604 = vst [vmem:[#allocation8 - $0x7] sm:$0x80] %v579
        %605 = vst [vmem:[#allocation9 - $0x7] sm:$0x80] %v595
        %s606 = sand.u32 %s154, 1
        %s607 = scalar_lea.sflag [#allocation12], %s606
        %s608 = sand.u32 %s154, 1
        %s609 = smul.addr %s608, 32
        %s610 = scalar_lea.vmem [#allocation16], %s609
        // Predicated region
        $region53: #{tpu_custom_call.1} parent=35 // pred_check
          %p611 = pneg %p164
        $region54: #{tpu_custom_call.1} parent=35 // pred_check_branch
          %613 = sbr.rel (%p611) target = $region56
        $region55: #{tpu_custom_call.1} parent=35 // pred_region
          %s614 = smul.u32 4, %s29
          %s616 = ssub.s32 512, 512
          %617 = vsyncadd %s607, %s616
          %s618 = smul.addr %s614, 2
          %s619 = sadd.s32 %s28, %s618
          %s620 = smul.addr %s619, 128
          %s621 = scalar_lea.hbm %s4, %s620
          %s622 = sshll.u32 %s610, 4
          %s623 = int_to_ptr.vmem [resolvable:$true] %s622
          %628 = dma.vmem_to_hbm [thread:$0]  %s623, 512, %s621, %s607, 128, 256, 8
        $region56: #{tpu_custom_call.1} parent=35 // pred_fallthru
          _
      $region36: #{tpu_custom_call.1} parent=5 // pred_fallthru
        _
      %p629 = scmp.le.s32.totalorder 2, %s19
      // Predicated region
      $region57: #{tpu_custom_call.1} parent=5 // pred_check
        %p630 = pneg %p629
      $region58: #{tpu_custom_call.1} parent=5 // pred_check_branch
        %632 = sbr.rel (%p630) target = $region60
      $region59: #{tpu_custom_call.1} parent=5 // pred_region
        %s633 = ssub.s32 %s19, 2
        // Predicated region
        $region61: #{tpu_custom_call.1} parent=59 // pred_check
          %p634 = pneg %p170
        $region62: #{tpu_custom_call.1} parent=59 // pred_check_branch
          %636 = sbr.rel (%p634) target = $region64
        $region63: #{tpu_custom_call.1} parent=59 // pred_region
          %s637 = sand.u32 %s155, 1
          %s638 = scalar_lea.sflag [#allocation12], %s637
          %s639 = sand.u32 %s155, 1
          %s640 = smul.addr %s639, 32
          %s641 = scalar_lea.vmem [#allocation16], %s640
          %642 = dma.done %s638, 512
        $region64: #{tpu_custom_call.1} parent=59 // pred_fallthru
          _
      $region60: #{tpu_custom_call.1} parent=5 // pred_fallthru
        _
    $region6: #{tpu_custom_call.1} parent=1 // loop_footer
      %s23 = sadd.s32 1, %s19
    $region7: #{tpu_custom_call.1} parent=1 // loop_footer_branch
      %18 = sbr.rel target = $region3
    $region8: #{tpu_custom_call.1} parent=1 // loop_exit
      _
    %643 = vsyncpa [#allocation11], 1
    %s644 = scalar_lea.sflag [#allocation11], 1
    %645 = vsyncpa %s644, 1
    %646 = vsyncpa [#allocation14], 1
    %s647 = scalar_lea.sflag [#allocation14], 1
    %648 = vsyncpa %s647, 1
    %649 = vsyncpa [#allocation12], 1
    %s650 = scalar_lea.sflag [#allocation12], 1
    %651 = vsyncpa %s650, 1

</llo_original>
